<compile_context>
chip_gen: v5e
topology: v5e:2x2
jax: 0.10.0
libtpu: 0.0.40
codegen_flags: <defaults>
</compile_context>

<pallas_src>
import functools

import jax
import jax.numpy as jnp
from jax.experimental import pallas as pl
from jax.experimental.pallas import tpu as pltpu


def _round_up(x: int, m: int) -> int:
    return ((x + m - 1) // m) * m


def answer_kernel(x_ref, w_ref, b_ref, out_ref):
    # x_ref  : [B, 2H]   resident activation (concat of dropout(M) and questions)
    # w_ref  : [2H, TN]  streamed, lane-dense weight tile
    # b_ref  : [1, TN]   bias tile
    # out_ref: [B, TN]
    z = jnp.dot(x_ref[...], w_ref[...], preferred_element_type=jnp.float32)
    out_ref[...] = (z + b_ref[...].astype(jnp.float32)).astype(out_ref.dtype)


def prepare_answer_params(weight, bias, *, weight_dtype=jnp.bfloat16,
                          target_tile_bytes=2 * 1024 * 1024):
    """One-time parameter preparation (hoisted out of the per-call path).

    weight : [V, 2H]  PyTorch nn.Linear layout
    bias   : [V]
    Returns (w_t [2H, Vpad] in `weight_dtype`, bias2d [1, Vpad] f32, tile_n).
    """
    V, twoH = weight.shape
    itemsize = jnp.dtype(weight_dtype).itemsize

    # Adaptive lane-dense vocab tile: ~target_tile_bytes of streamed weight per
    # tile, a multiple of 128, clamped to [128, 4096].
    tn = (target_tile_bytes // max(1, twoH * itemsize)) // 128 * 128
    tn = max(128, min(4096, int(tn)))
    v128 = _round_up(V, 128)
    tn = min(tn, v128)
    # Guarantee >= 2 vocab tiles when V allows it (feeds both v7x TensorCores).
    if v128 >= 256 and tn >= v128:
        tn = _round_up(v128 // 2, 128)
    v_pad = _round_up(V, tn)

    w_t = weight.T.astype(weight_dtype)          # [2H, V]: one-time transpose + cast
    b = bias.astype(jnp.float32)
    if v_pad != V:
        w_t = jnp.pad(w_t, ((0, 0), (0, v_pad - V)))
        b = jnp.pad(b, (0, v_pad - V))
    return w_t, b.reshape(1, v_pad), int(tn)


def _vmem_limit_bytes(need_bytes: int) -> int:
    # Leave headroom below the chip's physical VMEM (64 MiB/TC on v7x;
    # 128 MiB on v5e/v6e).
    cap = 48 * 1024 * 1024
    try:
        phys = pltpu.get_tpu_info().vmem_capacity_bytes
        cap = max(cap, int(phys) - 16 * 1024 * 1024)
    except Exception:
        pass
    return int(min(max(2 * need_bytes, 32 * 1024 * 1024), cap))


@functools.partial(jax.jit, static_argnames=("vocab_size", "tile_n"))
def answer_module_forward(M, questions, w_t, bias2d, *, vocab_size: int, tile_n: int):
    """Forward pass of AnswerModule (eval mode).

    M, questions : [B, 1, H]
    w_t          : [2H, Vpad]  from prepare_answer_params (lane-dense on vocab)
    bias2d       : [1, Vpad]   float32
    returns      : [B, vocab_size] float32
    """
    B, one, H = M.shape
    assert one == 1
    twoH, v_pad = w_t.shape
    assert twoH == 2 * H and v_pad % tile_n == 0

    # TODO(synk): training-mode dropout (p=0.1) on M not applied (eval semantics).
    x = jnp.concatenate([M.reshape(B, H), questions.reshape(B, H)], axis=1)
    x = x.astype(w_t.dtype)                      # tiny; MXU-native operand dtype

    tn = tile_n
    num_tiles = v_pad // tn
    w_itemsize = jnp.dtype(w_t.dtype).itemsize
    tile_bytes = twoH * tn * w_itemsize

    # Deepen the weight-stream pipeline only when tiles are small and numerous.
    w_spec_kwargs = {}
    n_weight_bufs = 2
    if num_tiles >= 4 and tile_bytes < (512 << 10):
        w_spec_kwargs["pipeline_mode"] = pl.Buffered(3)
        n_weight_bufs = 3

    vmem_need = (n_weight_bufs * tile_bytes          # streamed weight buffers
                 + 2 * (tn * 4)                      # bias tiles
                 + 2 * (B * tn * 4)                  # output tiles
                 + B * twoH * w_itemsize             # resident activation
                 + (1 << 20))                        # margin

    cost = pl.CostEstimate(
        flops=2 * B * twoH * v_pad,
        transcendentals=0,
        bytes_accessed=(twoH * v_pad * w_itemsize    # streamed weight (dominant)
                        + v_pad * 4                  # bias
                        + B * twoH * w_itemsize      # activation
                        + B * v_pad * 4),            # logits
    )

    out = pl.pallas_call(
        answer_kernel,
        out_shape=jax.ShapeDtypeStruct((B, v_pad), jnp.float32),
        grid_spec=pl.GridSpec(
            grid=(num_tiles,),
            in_specs=[
                pl.BlockSpec((B, twoH), lambda j: (0, 0)),                     # activation (resident)
                pl.BlockSpec((twoH, tn), lambda j: (0, j), **w_spec_kwargs),   # weight tile (streamed)
                pl.BlockSpec((1, tn), lambda j: (0, j)),                       # bias tile
            ],
            out_specs=pl.BlockSpec((B, tn), lambda j: (0, j)),
        ),
        compiler_params=pltpu.CompilerParams(
            dimension_semantics=("parallel",),       # independent vocab tiles (megacore on v7x)
            vmem_limit_bytes=_vmem_limit_bytes(vmem_need),
        ),
        cost_estimate=cost,
    )(x, w_t, bias2d)

    return out[:, :vocab_size]


if __name__ == "__main__":
    # Small shapes consistent with the module: batch=2, hidden=32, vocab=64.
    B, H, V = 2, 32, 64
    key = jax.random.PRNGKey(0)
    k_m, k_q, k_w, k_b = jax.random.split(key, 4)

    M = jax.random.normal(k_m, (B, 1, H), dtype=jnp.float32)
    questions = jax.random.normal(k_q, (B, 1, H), dtype=jnp.float32)

    # Deterministic xavier-normal-style init for the Linear weight [V, 2H].
    fan_in, fan_out = 2 * H, V
    std = (2.0 / (fan_in + fan_out)) ** 0.5
    weight = std * jax.random.normal(k_w, (V, 2 * H), dtype=jnp.float32)
    bias = 0.01 * jax.random.normal(k_b, (V,), dtype=jnp.float32)

    # One-time prep: transpose to [2H, V], bf16 streaming dtype, pad vocab once.
    w_t, bias2d, tn = prepare_answer_params(weight, bias, weight_dtype=jnp.bfloat16)

    out = answer_module_forward(M, questions, w_t, bias2d, vocab_size=V, tile_n=tn)
    out = jax.block_until_ready(out)
    assert out.shape == (B, V)

    # Reference checks in plain JAX (eval-mode forward: dropout is identity).
    concat = jnp.concatenate([M, questions], axis=2).reshape(B, 2 * H)
    # Same precision as the kernel streams (bf16 operands, f32 accumulation).
    ref_stream = jnp.dot(concat.astype(jnp.bfloat16), weight.T.astype(jnp.bfloat16),
                         preferred_element_type=jnp.float32) + bias
    # Full-f32 PyTorch reference (loose tolerance for bf16 weight streaming).
    ref_f32 = concat @ weight.T + bias
    assert jnp.allclose(out, ref_stream, atol=1e-3, rtol=1e-3)
    assert jnp.allclose(out, ref_f32, atol=5e-2, rtol=5e-2)

    print("KERNEL_OK")
</pallas_src>

<mosaic_0001>
module attributes {stable_mosaic.version = 11 : i64} {
  func.func @answer_kernel(%arg0: i32, %arg1: memref<2x64xbf16, #tpu.memory_space<vmem>>, %arg2: memref<64x128xbf16, #tpu.memory_space<vmem>>, %arg3: memref<1x128xf32, #tpu.memory_space<vmem>>, %arg4: memref<2x128xf32, #tpu.memory_space<vmem>>) attributes {dimension_semantics = [#tpu.dimension_semantics<parallel>], iteration_bounds = array<i64: 1>, scalar_prefetch = 0 : i64, scratch_operands = 0 : i64, tpu.core_type = #tpu.core_type<tc>, window_params = [{pipeline_mode = #tpu.pipeline_mode<synchronous>, transform_indices = @transform_0, window_bounds = array<i64: 2, 64>}, {transform_indices = @transform_1, window_bounds = array<i64: 64, 128>}, {transform_indices = @transform_2, window_bounds = array<i64: 1, 128>}, {transform_indices = @transform_3, window_bounds = array<i64: 2, 128>}]} {
    %c0 = arith.constant 0 : index
    %c0_0 = arith.constant 0 : index
    %0 = vector.load %arg1[%c0, %c0_0] : memref<2x64xbf16, #tpu.memory_space<vmem>>, vector<2x64xbf16>
    %c0_1 = arith.constant 0 : index
    %c0_2 = arith.constant 0 : index
    %1 = vector.load %arg2[%c0_1, %c0_2] : memref<64x128xbf16, #tpu.memory_space<vmem>>, vector<64x128xbf16>
    %cst = arith.constant dense<0.000000e+00> : vector<2x128xf32>
    %2 = tpu.matmul %0, %1, %cst {dimension_numbers = #tpu.dot_dimension_numbers<[1], [0], [0], [1], [0, 0, 1, 1], [], []>} : vector<2x64xbf16>, vector<64x128xbf16>, vector<2x128xf32> -> vector<2x128xf32>
    %c0_3 = arith.constant 0 : index
    %c0_4 = arith.constant 0 : index
    %3 = vector.load %arg3[%c0_3, %c0_4] : memref<1x128xf32, #tpu.memory_space<vmem>>, vector<1x128xf32>
    %4 = vector.broadcast %3 : vector<1x128xf32> to vector<2x128xf32>
    %5 = arith.addf %2, %4 : vector<2x128xf32>
    %c0_5 = arith.constant 0 : index
    %c0_6 = arith.constant 0 : index
    %6 = vector.load %arg4[%c0_5, %c0_6] : memref<2x128xf32, #tpu.memory_space<vmem>>, vector<2x128xf32>
    tpu.vector_store %arg4[%c0_5, %c0_6], %5 {strides = array<i32>} : memref<2x128xf32, #tpu.memory_space<vmem>>, vector<2x128xf32>,
    return
  }
  func.func @transform_0(%arg0: i32) -> (i32, i32) {
    %c0_i32 = arith.constant 0 : i32
    %c0_i32_0 = arith.constant 0 : i32
    %c0_i32_1 = arith.constant 0 : i32
    return %c0_i32, %c0_i32_0 : i32, i32
  }
  func.func @transform_1(%arg0: i32) -> (i32, i32) {
    %c0_i32 = arith.constant 0 : i32
    %c0_i32_0 = arith.constant 0 : i32
    return %c0_i32, %arg0 : i32, i32
  }
  func.func @transform_2(%arg0: i32) -> (i32, i32) {
    %c0_i32 = arith.constant 0 : i32
    %c0_i32_0 = arith.constant 0 : i32
    return %c0_i32, %arg0 : i32, i32
  }
  func.func @transform_3(%arg0: i32) -> (i32, i32) {
    %c0_i32 = arith.constant 0 : i32
    %c0_i32_0 = arith.constant 0 : i32
    return %c0_i32, %arg0 : i32, i32
  }
}

</mosaic_0001>

<llo_original>
// kernel: answer_module_forward.1
$region0: #{answer_module_forward.1}
  #allocation0 [shape = 'u32[]', space=smem, size = 0x4, offset = 0x4, fixed_abs, tag = 'smem constant byte address 0x4 - core index']
  #allocation1 [shape = 'u32[72,128]{1,0:T(1,128)}', space=vmem, size = 0x9000, scoped, tag = 'internal scratch']
  %s0 = inlined_call_operand.vmem [shape: bf16[2,64], index: 0, kind: input, shape index: {}]
  %s1 = inlined_call_operand.hbm [shape: bf16[64,128], index: 1, kind: input, shape index: {}]
  %s2 = inlined_call_operand.vmem [shape: f32[1,128], index: 2, kind: input, shape index: {}]
  %s3 = inlined_call_operand.hbm [shape: f32[2,128], index: 3, kind: output, shape index: {}]
  %s4 = sld [smem:[#allocation0]]
  $region26: #{answer_module_forward.1} parent=0
    _
  %s6 = ssub.s32 1, %s4
  %s7 = scalar_select 0, %s6, %s4
  $region1: #{answer_module_forward.1} parent=0
    #allocation2 [shape = 'u8[16384]{0}', space=vmem, size = 0x4000, scoped, tag = 'input window, operand 1, single buffered']
    #allocation3 [shape = 's32[1]{0}', space=sflag, size = 0x4, scoped, tag = 'scoped memory for answer_module_forward.1']
    #allocation4 [shape = 's32[1]{0}', space=sflag, size = 0x4, scoped, tag = 'scoped memory for answer_module_forward.1']
    #allocation5 [shape = 'u8[1024]{0}', space=vmem, size = 0x400, scoped, tag = 'output window, operand 0, single buffered']
    %8 = vsyncpa [#allocation3], 0
    %9 = vsyncpa [#allocation4], 0
    // Predicated region
    $region2: #{answer_module_forward.1} parent=1 // pred_check
      _
    $region3: #{answer_module_forward.1} parent=1 // pred_check_branch
      %11 = sbr.rel (0) target = $region5
    $region4: #{answer_module_forward.1} parent=1 // pred_region
      _
    $region5: #{answer_module_forward.1} parent=1 // pred_fallthru
      _
    // Predicated region
    $region6: #{answer_module_forward.1} parent=1 // pred_check
      _
    $region7: #{answer_module_forward.1} parent=1 // pred_check_branch
      %13 = sbr.rel (0) target = $region9
    $region8: #{answer_module_forward.1} parent=1 // pred_region
      %15 = vsyncadd [#allocation3], 0
      %s16 = sshll.u32 %s1, 4
      %s17 = int_to_ptr.hbm [resolvable:$true] %s16
      %s18 = sshll.u32 [#allocation2], 4
      %s19 = int_to_ptr.vmem [resolvable:$true] %s18
      %24 = dma.hbm_to_vmem [thread:$0]  %s17, 512, %s19, [#allocation3], 64, 64, 4
    $region9: #{answer_module_forward.1} parent=1 // pred_fallthru
      _
    // Predicated region
    $region10: #{answer_module_forward.1} parent=1 // pred_check
      _
    $region11: #{answer_module_forward.1} parent=1 // pred_check_branch
      %26 = sbr.rel (0) target = $region13
    $region12: #{answer_module_forward.1} parent=1 // pred_region
      _
    $region13: #{answer_module_forward.1} parent=1 // pred_fallthru
      _
    // Predicated region
    $region14: #{answer_module_forward.1} parent=1 // pred_check
      _
    $region15: #{answer_module_forward.1} parent=1 // pred_check_branch
      %28 = sbr.rel (0) target = $region17
    $region16: #{answer_module_forward.1} parent=1 // pred_region
      %30 = dma.done [#allocation3], 512
    $region17: #{answer_module_forward.1} parent=1 // pred_fallthru
      _
    %v32 = vld [vmem:[%s0] sm:$0x1]
    %v33 = vld [vmem:[#allocation2] sm:$0xf]
    %v34 = vld [vmem:[#allocation2 + $0x4] sm:$0xf]
    %v35 = vld [vmem:[#allocation2 + $0x8] sm:$0xf]
    %v36 = vld [vmem:[#allocation2 + $0xc] sm:$0xf]
    %v37 = vld [vmem:[#allocation2 + $0x10] sm:$0xf]
    %v38 = vld [vmem:[#allocation2 + $0x14] sm:$0xf]
    %v39 = vld [vmem:[#allocation2 + $0x18] sm:$0xf]
    %v40 = vld [vmem:[#allocation2 + $0x1c] sm:$0xf]
    %v41 = vld [vmem:[%s2] sm:$0x1]
    %v43 = vperm.slane %v41, 0
    %v53 = vunpack.c.l.b16 %v33
    %v54 = vunpack.c.l.b16 %v34
    %v55 = vunpack.c.l.b16 %v35
    %v56 = vunpack.c.l.b16 %v36
    %v57 = vunpack.c.l.b16 %v37
    %v58 = vunpack.c.l.b16 %v38
    %v59 = vunpack.c.l.b16 %v39
    %v60 = vunpack.c.l.b16 %v40
    %v61 = vpack.c.b16 %v54, %v53
    %v62 = vpack.c.b16 %v56, %v55
    %v63 = vpack.c.b16 %v58, %v57
    %v64 = vpack.c.b16 %v60, %v59
    %vm69 = vcmask 523264
    %v71 = vsel %vm69, %v32, 0
    %73 = vmatpush.bf16.msra.mxu0 0
    %74 = vmatpush.bf16.msra.mxu0 0
    %75 = vmatpush.bf16.msra.mxu0 0
    %76 = vmatpush.bf16.msra.mxu0 0
    %77 = vmatpush.bf16.msra.mxu0 %v64
    %78 = vmatpush.bf16.msra.mxu0 %v63
    %79 = vmatpush.bf16.msra.mxu0 %v62
    %80 = vmatpush.bf16.msra.mxu0 %v61
    %81 = vmatmul.bf16.gmra.mxu0 %v71
    %v82 = vpop.f32.mrf.mxu0
    %v83 = vadd.f32 %v43, %v82
    %v84 = vpop.f32.mrf.mxu0
    %85 = vdwg.mxu0
    %86 = vst [vmem:[#allocation5] sm:$0x3] %v83
    // Predicated region
    $region18: #{answer_module_forward.1} parent=1 // pred_check
      _
    $region19: #{answer_module_forward.1} parent=1 // pred_check_branch
      %88 = sbr.rel (0) target = $region21
    $region20: #{answer_module_forward.1} parent=1 // pred_region
      %90 = vsyncadd [#allocation4], 0
      %s92 = sshll.u32 [#allocation5], 4
      %s93 = int_to_ptr.vmem [resolvable:$true] %s92
      %s94 = sshll.u32 %s3, 4
      %s95 = int_to_ptr.hbm [resolvable:$true] %s94
      %97 = dma.vmem_to_hbm [thread:$0]  %s93, 32, %s95, [#allocation4]
    $region21: #{answer_module_forward.1} parent=1 // pred_fallthru
      _
    // Predicated region
    $region22: #{answer_module_forward.1} parent=1 // pred_check
      _
    $region23: #{answer_module_forward.1} parent=1 // pred_check_branch
      %99 = sbr.rel (0) target = $region25
    $region24: #{answer_module_forward.1} parent=1 // pred_region
      %101 = dma.done [#allocation4], 32
    $region25: #{answer_module_forward.1} parent=1 // pred_fallthru
      _
    %102 = vsyncpa [#allocation3], 1
    %103 = vsyncpa [#allocation4], 1

</llo_original>
